<compile_context>
chip_gen: v5e
topology: v5e:2x2
jax: 0.10.0
libtpu: 0.0.40
codegen_flags: <defaults>
</compile_context>

<pallas_src>
import functools

import jax
import jax.numpy as jnp
from jax.experimental import pallas as pl
from jax.experimental.pallas import tpu as pltpu


def _round_up(n, m):
    return ((n + m - 1) // m) * m


@functools.lru_cache(maxsize=None)
def _hw_plan():
    """Generation-aware (max batch tile, scoped-VMEM limit in bytes)."""
    vmem_cap = 64 * 1024 * 1024
    try:
        info = pltpu.get_tpu_info()
        vmem_cap = int(getattr(info, "vmem_capacity_bytes", vmem_cap))
    except Exception:  # interpret mode / API unavailable -> conservative plan
        pass
    if vmem_cap >= 96 * 1024 * 1024:      # v5e / v6e class (128 MiB per core)
        return 512, 96 * 1024 * 1024
    return 256, 48 * 1024 * 1024          # v7x class (64 MiB per core)


def _pick_tn(TM, Kp, Dp, itemsize, budget):
    """Largest N tile of W2 (multiple of 128, dividing Dp) fitting the budget."""
    n_lanes = Dp // 128
    for d in range(1, n_lanes + 1):
        if n_lanes % d:
            continue
        tn = Dp // d
        est = (2 * TM * Kp * 4                    # x/t/s input buffers (upper bound)
               + 2 * Kp * Dp * itemsize           # wcat (double-buffered)
               + 2 * Dp * tn * itemsize           # w2 N-tile (double-buffered)
               + (TM * Kp + TM * Dp) * itemsize   # xts / mish(h) VMEM scratch
               + 2 * TM * tn * 4                  # output buffers
               + 4 * Dp * 4)                      # biases
        if est <= budget:
            return tn
    # TODO(synk): if even TN=128 does not fit (Dp >~ 4k f32 on v7x), wcat itself
    # needs K/N tiling with an accumulator pass; not needed at these sizes.
    return 128


def _mish(v):
    # mish(x) = x * tanh(softplus(x)) = x * (u^2 + 2u) / (u^2 + 2u + 2), u = e^x.
    # One EUP transcendental per element; clamp at 20 is exact in f32 (ratio is
    # 1.0 beyond it).  Divide done as an EUP reciprocal to stay off the VALU.
    u = jnp.exp(jnp.minimum(v, 20.0))
    n = u * (u + 2.0)
    return v * (n * pl.reciprocal(n + 2.0, approx=False))


def _easy_block_kernel(x_ref, t_ref, s_ref, wcat_ref, bcat_ref, w2_ref, b2_ref,
                       o_ref, xts_ref, h_ref, *, dims):
    D, T, S, Kp = dims
    j = pl.program_id(1)

    @pl.when(j == 0)
    def _():
        # Assemble the fused [x | t | s | 0] row block directly in VMEM — no
        # padded activation tensor is materialized in HBM by the wrapper.
        xts_ref[:, 0:D] = x_ref[...].astype(xts_ref.dtype)
        xts_ref[:, D:D + T] = t_ref[...].astype(xts_ref.dtype)
        xts_ref[:, D + T:D + T + S] = s_ref[...].astype(xts_ref.dtype)
        if Kp > D + T + S:
            # Zero the padded K tail every (re)assembly: the matching wcat rows
            # are zero, but uninitialized VMEM could hold NaN/Inf (NaN*0=NaN).
            xts_ref[:, D + T + S:Kp] = jnp.zeros(
                (xts_ref.shape[0], Kp - (D + T + S)), xts_ref.dtype)
        # Fused block_1(x) + time_mlp(t) + state_mlp(s): ONE MXU pass.
        h = jnp.dot(xts_ref[...], wcat_ref[...],
                    preferred_element_type=jnp.float32) + bcat_ref[...]
        h_ref[...] = _mish(h).astype(h_ref.dtype)

    # block_2: (Mish already applied into h_ref) -> Linear -> Mish on this N tile.
    out = jnp.dot(h_ref[...], w2_ref[...],
                  preferred_element_type=jnp.float32) + b2_ref[...]
    o_ref[...] = _mish(out).astype(o_ref.dtype)


def prepare_params(params, input_dim, t_embed_dim, s_embed_dim,
                   compute_dtype=jnp.float32):
    """One-time fuse + pad of the weights (outside the hot path).

    Weights are concatenated along K (Wcat = [w1; wt; ws]) and the three biases
    pre-summed; feature axes padded to multiples of 128 with zeros.  Pass
    compute_dtype=jnp.bfloat16 on v6e/v7x for MXU throughput (deviates from the
    f32 PyTorch reference beyond 1e-4).
    """
    w1, b1, wt, bt, ws, bs, w2, b2 = params
    D, T, S = input_dim, t_embed_dim, s_embed_dim
    Dp = _round_up(D, 128)
    Kp = _round_up(D + T + S, 128)

    wcat = jnp.zeros((Kp, Dp), jnp.float32)
    wcat = wcat.at[:D, :D].set(w1)
    wcat = wcat.at[D:D + T, :D].set(wt)
    wcat = wcat.at[D + T:D + T + S, :D].set(ws)

    bcat = jnp.zeros((1, Dp), jnp.float32).at[0, :D].set(b1 + bt + bs)
    w2p = jnp.zeros((Dp, Dp), jnp.float32).at[:D, :D].set(w2)
    b2p = jnp.zeros((1, Dp), jnp.float32).at[0, :D].set(b2)
    return (wcat.astype(compute_dtype), bcat, w2p.astype(compute_dtype), b2p)


@jax.jit
def easy_block(x, t, s, prepared):
    """x: [B, D], t: [B, T], s: [B, S] -> [B, D] float32."""
    wcat, bcat, w2p, b2p = prepared
    B, D = x.shape
    T = t.shape[1]
    S = s.shape[1]
    Kp, Dp = wcat.shape
    compute_dtype = wcat.dtype
    itemsize = jnp.dtype(compute_dtype).itemsize

    tm_max, vmem_limit = _hw_plan()

    # Batch tiling that divides B tightly (avoids near-2x padding waste when B
    # is just above a multiple of the max tile).  Padding only when needed.
    if B <= tm_max:
        nb = 1
        TM = _round_up(B, 8)
    else:
        nb = pl.cdiv(B, tm_max)
        TM = _round_up(pl.cdiv(B, nb), 8)
    Bp = nb * TM
    if Bp != B:
        pad = Bp - B
        x = jnp.pad(x, ((0, pad), (0, 0)))
        t = jnp.pad(t, ((0, pad), (0, 0)))
        s = jnp.pad(s, ((0, pad), (0, 0)))

    # N tile of W2/output, shrunk only when resident weights would blow the
    # per-generation VMEM budget (matters for large D on v7x); nn=1 at small D.
    TN = _pick_tn(TM, Kp, Dp, itemsize, int(0.85 * vmem_limit))
    nn = Dp // TN

    kernel = functools.partial(_easy_block_kernel, dims=(D, T, S, Kp))

    flops = 2 * Bp * Kp * Dp + 2 * Bp * Dp * Dp
    bytes_accessed = (4 * Bp * (D + T + S) + itemsize * (Kp * Dp + Dp * Dp)
                      + 8 * Dp + 4 * Bp * Dp)

    out = pl.pallas_call(
        kernel,
        out_shape=jax.ShapeDtypeStruct((Bp, Dp), jnp.float32),
        grid=(nb, nn),
        in_specs=[
            # batch-tiled activations, unpadded along features
            pl.BlockSpec((TM, D), lambda i, j: (i, 0)),
            pl.BlockSpec((TM, T), lambda i, j: (i, 0)),
            pl.BlockSpec((TM, S), lambda i, j: (i, 0)),
            # weights/biases: constant (or j-only) block index -> resident / only
            # re-fetched across N tiles.
            # TODO(synk): pipeline_mode=pl.Buffered(1) on the constant-index
            # weight specs would halve their resident VMEM footprint on v7x.
            pl.BlockSpec((Kp, Dp), lambda i, j: (0, 0)),
            pl.BlockSpec((1, Dp), lambda i, j: (0, 0)),
            pl.BlockSpec((Dp, TN), lambda i, j: (0, j)),
            pl.BlockSpec((1, TN), lambda i, j: (0, j)),
        ],
        out_specs=pl.BlockSpec((TM, TN), lambda i, j: (i, j)),
        scratch_shapes=[
            pltpu.VMEM((TM, Kp), compute_dtype),   # assembled [x|t|s|0]
            pltpu.VMEM((TM, Dp), compute_dtype),   # mish(h), reused across N tiles
        ],
        compiler_params=pltpu.CompilerParams(
            # batch axis parallel -> megacore sharding on v7x (no-op on v5e/v6e).
            # TODO(synk): for single-batch-tile calls on v7x, parallelizing the N
            # axis instead (each core recomputing h) would use both TensorCores.
            dimension_semantics=("parallel", "arbitrary"),
            vmem_limit_bytes=vmem_limit,
        ),
        cost_estimate=pl.CostEstimate(
            flops=flops,
            transcendentals=4 * Bp * Dp,
            bytes_accessed=bytes_accessed,
        ),
    )(x, t, s, wcat, bcat, w2p, b2p)

    if Bp != B or Dp != D:
        out = out[:B, :D]
    return out


def init_params(key, input_dim, t_embed_dim, s_embed_dim):
    """Deterministic params.  Weights stored as [in, out] (transposed vs torch)."""
    def linear(k, fan_in, fan_out):
        kw, kb = jax.random.split(k)
        bound = 1.0 / jnp.sqrt(fan_in)
        w = jax.random.uniform(kw, (fan_in, fan_out), jnp.float32, -bound, bound)
        b = jax.random.uniform(kb, (fan_out,), jnp.float32, -bound, bound)
        return w, b

    k1, k2, k3, k4 = jax.random.split(key, 4)
    w1, b1 = linear(k1, input_dim, input_dim)      # block_1
    wt, bt = linear(k2, t_embed_dim, input_dim)    # time_mlp
    ws, bs = linear(k3, s_embed_dim, input_dim)    # state_mlp
    w2, b2 = linear(k4, input_dim, input_dim)      # block_2 Linear
    return (w1, b1, wt, bt, ws, bs, w2, b2)


def easy_block_ref(x, t, s, params):
    (w1, b1, wt, bt, ws, bs, w2, b2) = params

    def mish(v):
        sp = jnp.maximum(v, 0.0) + jnp.log1p(jnp.exp(-jnp.abs(v)))
        return v * jnp.tanh(sp)

    h = x @ w1 + b1 + t @ wt + bt + s @ ws + bs
    h = mish(h)
    h = h @ w2 + b2
    return mish(h)


if __name__ == "__main__":
    B, D, T, S = 2, 32, 16, 8
    key = jax.random.PRNGKey(0)
    kx, kt, ks, kp = jax.random.split(key, 4)
    x = jax.random.normal(kx, (B, D), jnp.float32)
    t = jax.random.normal(kt, (B, T), jnp.float32)
    s = jax.random.normal(ks, (B, S), jnp.float32)

    params = init_params(kp, D, T, S)
    prepared = prepare_params(params, D, T, S)   # f32 path matches torch numerics

    out = easy_block(x, t, s, prepared)
    out = jax.block_until_ready(out)

    ref = easy_block_ref(x, t, s, params)
    assert out.shape == (B, D)
    assert jnp.allclose(out, ref, atol=1e-4, rtol=1e-4), float(
        jnp.max(jnp.abs(out - ref)))
    print("KERNEL_OK")
</pallas_src>

<mosaic_0001>
module attributes {stable_mosaic.version = 11 : i64} {
  func.func @_easy_block_kernel(%arg0: i32, %arg1: i32, %arg2: memref<8x32xf32, #tpu.memory_space<vmem>>, %arg3: memref<8x16xf32, #tpu.memory_space<vmem>>, %arg4: memref<8x8xf32, #tpu.memory_space<vmem>>, %arg5: memref<128x128xf32, #tpu.memory_space<vmem>>, %arg6: memref<1x128xf32, #tpu.memory_space<vmem>>, %arg7: memref<128x128xf32, #tpu.memory_space<vmem>>, %arg8: memref<1x128xf32, #tpu.memory_space<vmem>>, %arg9: memref<8x128xf32, #tpu.memory_space<vmem>>, %arg10: memref<8x128xf32, #tpu.memory_space<vmem>>, %arg11: memref<8x128xf32, #tpu.memory_space<vmem>>) attributes {dimension_semantics = [#tpu.dimension_semantics<parallel>, #tpu.dimension_semantics<arbitrary>], iteration_bounds = array<i64: 1, 1>, scalar_prefetch = 0 : i64, scratch_operands = 2 : i64, tpu.core_type = #tpu.core_type<tc>, window_params = [{transform_indices = @transform_0, window_bounds = array<i64: 8, 32>}, {transform_indices = @transform_1, window_bounds = array<i64: 8, 16>}, {transform_indices = @transform_2, window_bounds = array<i64: 8, 8>}, {pipeline_mode = #tpu.pipeline_mode<synchronous>, transform_indices = @transform_3, window_bounds = array<i64: 128, 128>}, {pipeline_mode = #tpu.pipeline_mode<synchronous>, transform_indices = @transform_4, window_bounds = array<i64: 1, 128>}, {transform_indices = @transform_5, window_bounds = array<i64: 128, 128>}, {transform_indices = @transform_6, window_bounds = array<i64: 1, 128>}, {transform_indices = @transform_7, window_bounds = array<i64: 8, 128>}]} {
    %c0_i32 = arith.constant 0 : i32
    %0 = arith.cmpi eq, %arg1, %c0_i32 : i32
    %1 = arith.extui %0 : i1 to i32
    %c0_i32_0 = arith.constant 0 : i32
    %2 = arith.cmpi ne, %1, %c0_i32_0 : i32
    scf.if %2 {
      %c0_11 = arith.constant 0 : index
      %c0_12 = arith.constant 0 : index
      %21 = vector.load %arg2[%c0_11, %c0_12] : memref<8x32xf32, #tpu.memory_space<vmem>>, vector<8x32xf32>
      %c0_13 = arith.constant 0 : index
      %c0_14 = arith.constant 0 : index
      %22 = vector.load %arg10[%c0_13, %c0_14] : memref<8x128xf32, #tpu.memory_space<vmem>>, vector<8x32xf32>
      tpu.vector_store %arg10[%c0_13, %c0_14], %21 {strides = array<i32>} : memref<8x128xf32, #tpu.memory_space<vmem>>, vector<8x32xf32>,
      %c0_15 = arith.constant 0 : index
      %c0_16 = arith.constant 0 : index
      %23 = vector.load %arg3[%c0_15, %c0_16] : memref<8x16xf32, #tpu.memory_space<vmem>>, vector<8x16xf32>
      %c0_17 = arith.constant 0 : index
      %c32 = arith.constant 32 : index
      %24 = vector.load %arg10[%c0_17, %c32] : memref<8x128xf32, #tpu.memory_space<vmem>>, vector<8x16xf32>
      tpu.vector_store %arg10[%c0_17, %c32], %23 {strides = array<i32>} : memref<8x128xf32, #tpu.memory_space<vmem>>, vector<8x16xf32>,
      %c0_18 = arith.constant 0 : index
      %c0_19 = arith.constant 0 : index
      %25 = vector.load %arg4[%c0_18, %c0_19] : memref<8x8xf32, #tpu.memory_space<vmem>>, vector<8x8xf32>
      %c0_20 = arith.constant 0 : index
      %c48 = arith.constant 48 : index
      %26 = vector.load %arg10[%c0_20, %c48] : memref<8x128xf32, #tpu.memory_space<vmem>>, vector<8x8xf32>
      tpu.vector_store %arg10[%c0_20, %c48], %25 {strides = array<i32>} : memref<8x128xf32, #tpu.memory_space<vmem>>, vector<8x8xf32>,
      %cst_21 = arith.constant 0.000000e+00 : f32
      %27 = vector.broadcast %cst_21 : f32 to vector<8x72xf32>
      %c0_22 = arith.constant 0 : index
      %c56 = arith.constant 56 : index
      %28 = vector.load %arg10[%c0_22, %c56] : memref<8x128xf32, #tpu.memory_space<vmem>>, vector<8x72xf32>
      tpu.vector_store %arg10[%c0_22, %c56], %27 {strides = array<i32>} : memref<8x128xf32, #tpu.memory_space<vmem>>, vector<8x72xf32>,
      %c0_23 = arith.constant 0 : index
      %c0_24 = arith.constant 0 : index
      %29 = vector.load %arg10[%c0_23, %c0_24] : memref<8x128xf32, #tpu.memory_space<vmem>>, vector<8x128xf32>
      %c0_25 = arith.constant 0 : index
      %c0_26 = arith.constant 0 : index
      %30 = vector.load %arg5[%c0_25, %c0_26] : memref<128x128xf32, #tpu.memory_space<vmem>>, vector<128x128xf32>
      %cst_27 = arith.constant dense<0.000000e+00> : vector<8x128xf32>
      %31 = tpu.matmul %29, %30, %cst_27 {dimension_numbers = #tpu.dot_dimension_numbers<[1], [0], [0], [1], [0, 0, 1, 1], [], []>} : vector<8x128xf32>, vector<128x128xf32>, vector<8x128xf32> -> vector<8x128xf32>
      %c0_28 = arith.constant 0 : index
      %c0_29 = arith.constant 0 : index
      %32 = vector.load %arg6[%c0_28, %c0_29] : memref<1x128xf32, #tpu.memory_space<vmem>>, vector<1x128xf32>
      %33 = vector.broadcast %32 : vector<1x128xf32> to vector<8x128xf32>
      %34 = arith.addf %31, %33 : vector<8x128xf32>
      %cst_30 = arith.constant 2.000000e+01 : f32
      %35 = vector.broadcast %cst_30 : f32 to vector<8x128xf32>
      %36 = arith.minimumf %34, %35 : vector<8x128xf32>
      %37 = math.exp %36 : vector<8x128xf32>
      %cst_31 = arith.constant 2.000000e+00 : f32
      %38 = vector.broadcast %cst_31 : f32 to vector<8x128xf32>
      %39 = arith.addf %37, %38 : vector<8x128xf32>
      %40 = arith.mulf %37, %39 : vector<8x128xf32>
      %cst_32 = arith.constant 2.000000e+00 : f32
      %41 = vector.broadcast %cst_32 : f32 to vector<8x128xf32>
      %42 = arith.addf %40, %41 : vector<8x128xf32>
      %43 = tpu.reciprocal %42 : vector<8x128xf32> -> vector<8x128xf32>
      %44 = arith.mulf %40, %43 : vector<8x128xf32>
      %45 = arith.mulf %34, %44 : vector<8x128xf32>
      %c0_33 = arith.constant 0 : index
      %c0_34 = arith.constant 0 : index
      %46 = vector.load %arg11[%c0_33, %c0_34] : memref<8x128xf32, #tpu.memory_space<vmem>>, vector<8x128xf32>
      tpu.vector_store %arg11[%c0_33, %c0_34], %45 {strides = array<i32>} : memref<8x128xf32, #tpu.memory_space<vmem>>, vector<8x128xf32>,
    } else {
    }
    %c0 = arith.constant 0 : index
    %c0_1 = arith.constant 0 : index
    %3 = vector.load %arg11[%c0, %c0_1] : memref<8x128xf32, #tpu.memory_space<vmem>>, vector<8x128xf32>
    %c0_2 = arith.constant 0 : index
    %c0_3 = arith.constant 0 : index
    %4 = vector.load %arg7[%c0_2, %c0_3] : memref<128x128xf32, #tpu.memory_space<vmem>>, vector<128x128xf32>
    %cst = arith.constant dense<0.000000e+00> : vector<8x128xf32>
    %5 = tpu.matmul %3, %4, %cst {dimension_numbers = #tpu.dot_dimension_numbers<[1], [0], [0], [1], [0, 0, 1, 1], [], []>} : vector<8x128xf32>, vector<128x128xf32>, vector<8x128xf32> -> vector<8x128xf32>
    %c0_4 = arith.constant 0 : index
    %c0_5 = arith.constant 0 : index
    %6 = vector.load %arg8[%c0_4, %c0_5] : memref<1x128xf32, #tpu.memory_space<vmem>>, vector<1x128xf32>
    %7 = vector.broadcast %6 : vector<1x128xf32> to vector<8x128xf32>
    %8 = arith.addf %5, %7 : vector<8x128xf32>
    %cst_6 = arith.constant 2.000000e+01 : f32
    %9 = vector.broadcast %cst_6 : f32 to vector<8x128xf32>
    %10 = arith.minimumf %8, %9 : vector<8x128xf32>
    %11 = math.exp %10 : vector<8x128xf32>
    %cst_7 = arith.constant 2.000000e+00 : f32
    %12 = vector.broadcast %cst_7 : f32 to vector<8x128xf32>
    %13 = arith.addf %11, %12 : vector<8x128xf32>
    %14 = arith.mulf %11, %13 : vector<8x128xf32>
    %cst_8 = arith.constant 2.000000e+00 : f32
    %15 = vector.broadcast %cst_8 : f32 to vector<8x128xf32>
    %16 = arith.addf %14, %15 : vector<8x128xf32>
    %17 = tpu.reciprocal %16 : vector<8x128xf32> -> vector<8x128xf32>
    %18 = arith.mulf %14, %17 : vector<8x128xf32>
    %19 = arith.mulf %8, %18 : vector<8x128xf32>
    %c0_9 = arith.constant 0 : index
    %c0_10 = arith.constant 0 : index
    %20 = vector.load %arg9[%c0_9, %c0_10] : memref<8x128xf32, #tpu.memory_space<vmem>>, vector<8x128xf32>
    tpu.vector_store %arg9[%c0_9, %c0_10], %19 {strides = array<i32>} : memref<8x128xf32, #tpu.memory_space<vmem>>, vector<8x128xf32>,
    return
  }
  func.func @transform_0(%arg0: i32, %arg1: i32) -> (i32, i32) {
    %c0_i32 = arith.constant 0 : i32
    %c0_i32_0 = arith.constant 0 : i32
    return %arg0, %c0_i32 : i32, i32
  }
  func.func @transform_1(%arg0: i32, %arg1: i32) -> (i32, i32) {
    %c0_i32 = arith.constant 0 : i32
    %c0_i32_0 = arith.constant 0 : i32
    return %arg0, %c0_i32 : i32, i32
  }
  func.func @transform_2(%arg0: i32, %arg1: i32) -> (i32, i32) {
    %c0_i32 = arith.constant 0 : i32
    %c0_i32_0 = arith.constant 0 : i32
    return %arg0, %c0_i32 : i32, i32
  }
  func.func @transform_3(%arg0: i32, %arg1: i32) -> (i32, i32) {
    %c0_i32 = arith.constant 0 : i32
    %c0_i32_0 = arith.constant 0 : i32
    %c0_i32_1 = arith.constant 0 : i32
    return %c0_i32, %c0_i32_0 : i32, i32
  }
  func.func @transform_4(%arg0: i32, %arg1: i32) -> (i32, i32) {
    %c0_i32 = arith.constant 0 : i32
    %c0_i32_0 = arith.constant 0 : i32
    %c0_i32_1 = arith.constant 0 : i32
    return %c0_i32, %c0_i32_0 : i32, i32
  }
  func.func @transform_5(%arg0: i32, %arg1: i32) -> (i32, i32) {
    %c0_i32 = arith.constant 0 : i32
    %c0_i32_0 = arith.constant 0 : i32
    return %c0_i32, %arg1 : i32, i32
  }
  func.func @transform_6(%arg0: i32, %arg1: i32) -> (i32, i32) {
    %c0_i32 = arith.constant 0 : i32
    %c0_i32_0 = arith.constant 0 : i32
    return %c0_i32, %arg1 : i32, i32
  }
  func.func @transform_7(%arg0: i32, %arg1: i32) -> (i32, i32) {
    %c0_i32 = arith.constant 0 : i32
    return %arg0, %arg1 : i32, i32
  }
}

</mosaic_0001>

<llo_original>
// kernel: easy_block.1
$region0: #{easy_block.1}
  #allocation0 [shape = 'u32[]', space=smem, size = 0x4, offset = 0x4, fixed_abs, tag = 'smem constant byte address 0x4 - core index']
  #allocation1 [shape = 'u32[72,128]{1,0:T(1,128)}', space=vmem, size = 0x9000, scoped, tag = 'internal scratch']
  #allocation2 [shape = 'f32[8,128]{1,0:T(8,128)}', space=vmem, size = 0x1000, scoped, tag = 'scratch operand']
  #allocation3 [shape = 'f32[8,128]{1,0:T(8,128)}', space=vmem, size = 0x1000, scoped, tag = 'scratch operand']
  %s0 = inlined_call_operand.vmem [shape: f32[8,32], index: 0, kind: input, shape index: {}]
  %s1 = inlined_call_operand.vmem [shape: f32[8,16], index: 1, kind: input, shape index: {}]
  %s2 = inlined_call_operand.vmem [shape: f32[8,8], index: 2, kind: input, shape index: {}]
  %s3 = inlined_call_operand.hbm [shape: f32[128,128], index: 3, kind: input, shape index: {}]
  %s4 = inlined_call_operand.vmem [shape: f32[1,128], index: 4, kind: input, shape index: {}]
  %s5 = inlined_call_operand.hbm [shape: f32[128,128], index: 5, kind: input, shape index: {}]
  %s6 = inlined_call_operand.vmem [shape: f32[1,128], index: 6, kind: input, shape index: {}]
  %s7 = inlined_call_operand.vmem [shape: f32[8,128], index: 7, kind: output, shape index: {}]
  %s8 = sld [smem:[#allocation0]]
  $region50: #{easy_block.1} parent=0
    _
  %s10 = ssub.s32 1, %s8
  %s11 = scalar_select 0, %s10, %s8
  $region1: #{easy_block.1} parent=0
    #allocation4 [shape = 'u8[65536]{0}', space=vmem, size = 0x10000, scoped, tag = 'input window, operand 3, single buffered']
    #allocation5 [shape = 's32[1]{0}', space=sflag, size = 0x4, scoped, tag = 'scoped memory for easy_block.1']
    #allocation6 [shape = 'u8[65536]{0}', space=vmem, size = 0x10000, scoped, tag = 'input window, operand 5, single buffered']
    #allocation7 [shape = 's32[1]{0}', space=sflag, size = 0x4, scoped, tag = 'scoped memory for easy_block.1']
    %12 = vsyncpa [#allocation5], 0
    %13 = vsyncpa [#allocation7], 0
    // Predicated region
    $region2: #{easy_block.1} parent=1 // pred_check
      _
    $region3: #{easy_block.1} parent=1 // pred_check_branch
      %15 = sbr.rel (0) target = $region5
    $region4: #{easy_block.1} parent=1 // pred_region
      _
    $region5: #{easy_block.1} parent=1 // pred_fallthru
      _
    // Predicated region
    $region6: #{easy_block.1} parent=1 // pred_check
      _
    $region7: #{easy_block.1} parent=1 // pred_check_branch
      %17 = sbr.rel (0) target = $region9
    $region8: #{easy_block.1} parent=1 // pred_region
      _
    $region9: #{easy_block.1} parent=1 // pred_fallthru
      _
    // Predicated region
    $region10: #{easy_block.1} parent=1 // pred_check
      _
    $region11: #{easy_block.1} parent=1 // pred_check_branch
      %19 = sbr.rel (0) target = $region13
    $region12: #{easy_block.1} parent=1 // pred_region
      _
    $region13: #{easy_block.1} parent=1 // pred_fallthru
      _
    // Predicated region
    $region14: #{easy_block.1} parent=1 // pred_check
      _
    $region15: #{easy_block.1} parent=1 // pred_check_branch
      %21 = sbr.rel (0) target = $region17
    $region16: #{easy_block.1} parent=1 // pred_region
      %23 = vsyncadd [#allocation5], 0
      %s24 = sshll.u32 %s3, 4
      %s25 = int_to_ptr.hbm [resolvable:$true] %s24
      %s26 = sshll.u32 [#allocation4], 4
      %s27 = int_to_ptr.vmem [resolvable:$true] %s26
      %32 = dma.hbm_to_vmem [thread:$0]  %s25, 2048, %s27, [#allocation5], 128, 128, 8
    $region17: #{easy_block.1} parent=1 // pred_fallthru
      _
    // Predicated region
    $region18: #{easy_block.1} parent=1 // pred_check
      _
    $region19: #{easy_block.1} parent=1 // pred_check_branch
      %34 = sbr.rel (0) target = $region21
    $region20: #{easy_block.1} parent=1 // pred_region
      _
    $region21: #{easy_block.1} parent=1 // pred_fallthru
      _
    // Predicated region
    $region22: #{easy_block.1} parent=1 // pred_check
      _
    $region23: #{easy_block.1} parent=1 // pred_check_branch
      %36 = sbr.rel (0) target = $region25
    $region24: #{easy_block.1} parent=1 // pred_region
      %38 = vsyncadd [#allocation7], 0
      %s39 = sshll.u32 %s5, 4
      %s40 = int_to_ptr.hbm [resolvable:$true] %s39
      %s41 = sshll.u32 [#allocation6], 4
      %s42 = int_to_ptr.vmem [resolvable:$true] %s41
      %47 = dma.hbm_to_vmem [thread:$0]  %s40, 2048, %s42, [#allocation7], 128, 128, 8
    $region25: #{easy_block.1} parent=1 // pred_fallthru
      _
    // Predicated region
    $region26: #{easy_block.1} parent=1 // pred_check
      _
    $region27: #{easy_block.1} parent=1 // pred_check_branch
      %49 = sbr.rel (0) target = $region29
    $region28: #{easy_block.1} parent=1 // pred_region
      _
    $region29: #{easy_block.1} parent=1 // pred_fallthru
      _
    // Predicated region
    $region30: #{easy_block.1} parent=1 // pred_check
      _
    $region31: #{easy_block.1} parent=1 // pred_check_branch
      %51 = sbr.rel (0) target = $region33
    $region32: #{easy_block.1} parent=1 // pred_region
      %53 = dma.done [#allocation5], 2048
    $region33: #{easy_block.1} parent=1 // pred_fallthru
      _
    // Predicated region
    $region34: #{easy_block.1} parent=1 // pred_check
      _
    $region35: #{easy_block.1} parent=1 // pred_check_branch
      %55 = sbr.rel (0) target = $region37
    $region36: #{easy_block.1} parent=1 // pred_region
      %57 = dma.done [#allocation7], 2048
    $region37: #{easy_block.1} parent=1 // pred_fallthru
      _
    %p58 = scmp.eq.s32.totalorder 0, 0
    // Predicated region
    $region38: #{easy_block.1} parent=1 // pred_check
      %p59 = pneg %p58
    $region39: #{easy_block.1} parent=1 // pred_check_branch
      %61 = sbr.rel (%p59) target = $region41
    $region40: #{easy_block.1} parent=1 // pred_region
      %v62 = vld [vmem:[%s0] sm:$0xff]
      %vm63 = vcmask 261120
      %64 = vst.msk [vmem:[#allocation2] sm:$0xff] %vm63, %v62
      %v65 = vld [vmem:[%s1] sm:$0xff]
      %67 = vrot.lane.b32.xlu0 %v65, 32
      %v68 = vpop.permute.xlu0 %67
      %vm70 = vcmask 392448
      %71 = vst.msk [vmem:[#allocation2] sm:$0xff] %vm70, %v68
      %v72 = vld [vmem:[%s2] sm:$0xff]
      %74 = vrot.lane.b32.xlu0 %v72, 48
      %v75 = vpop.permute.xlu0 %74
      %vm77 = vcmask 458112
      %78 = vst.msk [vmem:[#allocation2] sm:$0xff] %vm77, %v75
      %vm79 = vcmask 1048000
      %80 = vst.msk [vmem:[#allocation2] sm:$0xff] %vm79, 0.0
      %v81 = vld [vmem:[#allocation2] sm:$0xff]
      %v82 = vld [vmem:[#allocation4] sm:$0xff]
      %v83 = vld [vmem:[#allocation4 + $0x8] sm:$0xff]
      %v84 = vld [vmem:[#allocation4 + $0x10] sm:$0xff]
      %v85 = vld [vmem:[#allocation4 + $0x18] sm:$0xff]
      %v86 = vld [vmem:[#allocation4 + $0x20] sm:$0xff]
      %v87 = vld [vmem:[#allocation4 + $0x28] sm:$0xff]
      %v88 = vld [vmem:[#allocation4 + $0x30] sm:$0xff]
      %v89 = vld [vmem:[#allocation4 + $0x38] sm:$0xff]
      %v90 = vld [vmem:[#allocation4 + $0x40] sm:$0xff]
      %v91 = vld [vmem:[#allocation4 + $0x48] sm:$0xff]
      %v92 = vld [vmem:[#allocation4 + $0x50] sm:$0xff]
      %v93 = vld [vmem:[#allocation4 + $0x58] sm:$0xff]
      %v94 = vld [vmem:[#allocation4 + $0x60] sm:$0xff]
      %v95 = vld [vmem:[#allocation4 + $0x68] sm:$0xff]
      %v96 = vld [vmem:[#allocation4 + $0x70] sm:$0xff]
      %v97 = vld [vmem:[#allocation4 + $0x78] sm:$0xff]
      %v98 = vld [vmem:[%s4] sm:$0x1]
      %v100 = vperm.slane %v98, 0
      %102 = vmatpush.msra.mxu0 %v97
      %103 = vmatpush.msra.mxu0 %v96
      %104 = vmatpush.msra.mxu0 %v95
      %105 = vmatpush.msra.mxu0 %v94
      %106 = vmatpush.msra.mxu0 %v93
      %107 = vmatpush.msra.mxu0 %v92
      %108 = vmatpush.msra.mxu0 %v91
      %109 = vmatpush.msra.mxu0 %v90
      %110 = vmatpush.msra.mxu0 %v89
      %111 = vmatpush.msra.mxu0 %v88
      %112 = vmatpush.msra.mxu0 %v87
      %113 = vmatpush.msra.mxu0 %v86
      %114 = vmatpush.msra.mxu0 %v85
      %115 = vmatpush.msra.mxu0 %v84
      %116 = vmatpush.msra.mxu0 %v83
      %117 = vmatpush.msra.mxu0 %v82
      %118 = vmatmul.f32.gmra.mxu0 %v81
      %v119 = vpop.f32.mrf.mxu0
      %v120 = vadd.f32 %v100, %v119
      %121 = vdwg.mxu0
      %v122 = vmin.f32 %v120, 20.0
      %v123 = vmul.f32 %v122, 1.442695
      %v124 = vpow.pop %v123
      %v125 = vadd.f32 %v124, 2.0
      %v126 = vmul.f32 %v124, %v125
      %v127 = vadd.f32 %v126, 2.0
      %v128 = vrcp.pop %v127
      %v129 = vmul.f32 %v127, %v128
      %v130 = vsub.f32 1.0, %v129
      %v131 = vmul.f32 %v128, %v130
      %v132 = vadd.f32 %v128, %v131
      %vm133 = vweird.f32 %v127
      %vm134 = vweird.f32 %v128
      %vm135 = vmor %vm133, %vm134
      %v136 = vsel %vm135, %v128, %v132
      %v137 = vand.u32 2147483647, %v127
      %vm138 = vcmp.eq.f32.partialorder %v137, 8.507059e+37
      %v139 = vand.u32 %v127, 2147483648
      %v140 = vor.u32 1.1754944e-38, %v139
      %v141 = vsel %vm138, %v140, %v136
      %v142 = vmul.f32 %v126, %v141
      %v143 = vmul.f32 %v120, %v142
      %144 = vst [vmem:[#allocation3] sm:$0xff] %v143
    $region41: #{easy_block.1} parent=1 // pred_fallthru
      _
    %v145 = vld [vmem:[#allocation3] sm:$0xff]
    %v146 = vld [vmem:[#allocation6] sm:$0xff]
    %v147 = vld [vmem:[#allocation6 + $0x8] sm:$0xff]
    %v148 = vld [vmem:[#allocation6 + $0x10] sm:$0xff]
    %v149 = vld [vmem:[#allocation6 + $0x18] sm:$0xff]
    %v150 = vld [vmem:[#allocation6 + $0x20] sm:$0xff]
    %v151 = vld [vmem:[#allocation6 + $0x28] sm:$0xff]
    %v152 = vld [vmem:[#allocation6 + $0x30] sm:$0xff]
    %v153 = vld [vmem:[#allocation6 + $0x38] sm:$0xff]
    %v154 = vld [vmem:[#allocation6 + $0x40] sm:$0xff]
    %v155 = vld [vmem:[#allocation6 + $0x48] sm:$0xff]
    %v156 = vld [vmem:[#allocation6 + $0x50] sm:$0xff]
    %v157 = vld [vmem:[#allocation6 + $0x58] sm:$0xff]
    %v158 = vld [vmem:[#allocation6 + $0x60] sm:$0xff]
    %v159 = vld [vmem:[#allocation6 + $0x68] sm:$0xff]
    %v160 = vld [vmem:[#allocation6 + $0x70] sm:$0xff]
    %v161 = vld [vmem:[#allocation6 + $0x78] sm:$0xff]
    %v162 = vld [vmem:[%s6] sm:$0x1]
    %v164 = vperm.slane %v162, 0
    %166 = vmatpush.msra.mxu0 %v161
    %167 = vmatpush.msra.mxu0 %v160
    %168 = vmatpush.msra.mxu0 %v159
    %169 = vmatpush.msra.mxu0 %v158
    %170 = vmatpush.msra.mxu0 %v157
    %171 = vmatpush.msra.mxu0 %v156
    %172 = vmatpush.msra.mxu0 %v155
    %173 = vmatpush.msra.mxu0 %v154
    %174 = vmatpush.msra.mxu0 %v153
    %175 = vmatpush.msra.mxu0 %v152
    %176 = vmatpush.msra.mxu0 %v151
    %177 = vmatpush.msra.mxu0 %v150
    %178 = vmatpush.msra.mxu0 %v149
    %179 = vmatpush.msra.mxu0 %v148
    %180 = vmatpush.msra.mxu0 %v147
    %181 = vmatpush.msra.mxu0 %v146
    %182 = vmatmul.f32.gmra.mxu0 %v145
    %v183 = vpop.f32.mrf.mxu0
    %v184 = vadd.f32 %v164, %v183
    %185 = vdwg.mxu0
    %v186 = vmin.f32 %v184, 20.0
    %v187 = vmul.f32 %v186, 1.442695
    %v188 = vpow.pop %v187
    %v189 = vadd.f32 %v188, 2.0
    %v190 = vmul.f32 %v188, %v189
    %v191 = vadd.f32 %v190, 2.0
    %v192 = vrcp.pop %v191
    %v193 = vmul.f32 %v191, %v192
    %v194 = vsub.f32 1.0, %v193
    %v195 = vmul.f32 %v192, %v194
    %v196 = vadd.f32 %v192, %v195
    %vm197 = vweird.f32 %v191
    %vm198 = vweird.f32 %v192
    %vm199 = vmor %vm197, %vm198
    %v200 = vsel %vm199, %v192, %v196
    %v201 = vand.u32 2147483647, %v191
    %vm202 = vcmp.eq.f32.partialorder %v201, 8.507059e+37
    %v203 = vand.u32 %v191, 2147483648
    %v204 = vor.u32 1.1754944e-38, %v203
    %v205 = vsel %vm202, %v204, %v200
    %v206 = vmul.f32 %v190, %v205
    %v207 = vmul.f32 %v184, %v206
    %208 = vst [vmem:[%s7] sm:$0xff] %v207
    // Predicated region
    $region42: #{easy_block.1} parent=1 // pred_check
      _
    $region43: #{easy_block.1} parent=1 // pred_check_branch
      %210 = sbr.rel (0) target = $region45
    $region44: #{easy_block.1} parent=1 // pred_region
      _
    $region45: #{easy_block.1} parent=1 // pred_fallthru
      _
    // Predicated region
    $region46: #{easy_block.1} parent=1 // pred_check
      _
    $region47: #{easy_block.1} parent=1 // pred_check_branch
      %212 = sbr.rel (0) target = $region49
    $region48: #{easy_block.1} parent=1 // pred_region
      _
    $region49: #{easy_block.1} parent=1 // pred_fallthru
      _
    %213 = vsyncpa [#allocation5], 1
    %214 = vsyncpa [#allocation7], 1

</llo_original>
